<compile_context>
chip_gen: v6e
topology: v6e:2x2x1
jax: 0.10.0
libtpu: 0.0.40
codegen_flags: <defaults>
</compile_context>

<pallas_src>
import jax
import jax.numpy as jnp
from jax.experimental import pallas as pl
from jax.experimental.pallas import tpu as pltpu


def _make_divisible(v, divisor, min_value=None):
    if min_value is None:
        min_value = divisor
    new_v = max(min_value, int(v + divisor / 2) // divisor * divisor)
    if new_v < 0.9 * v:
        new_v += divisor
    return new_v


# ----------------------------------------------------------------------------
# Fused SqueezeExcitation kernel (one batch element per grid step)
# ----------------------------------------------------------------------------
def _se_kernel(x_ref, w1t_ref, b1_ref, w2_ref, b2_ref, o_ref):
    # x_ref: (C, HW) for the current batch element (batch dim squeezed by BlockSpec).
    x = x_ref[...].astype(jnp.float32)                                # (C, HW)
    inv_hw = 1.0 / x.shape[-1]
    # Global average pool over spatial (lane) axis -> per-channel column.
    pooled = jnp.sum(x, axis=-1, keepdims=True) * inv_hw              # (C, 1)

    # fc1 (1x1 conv): contraction over C (sublanes).  w1t: (C, S).
    h = jnp.sum(w1t_ref[...] * pooled, axis=0, keepdims=True) + b1_ref[...]   # (1, S)
    h = jnp.maximum(h, 0.0)                                           # ReLU

    # fc2 (1x1 conv): contraction over S (lanes).  w2: (C, S).
    s = jnp.sum(w2_ref[...] * h, axis=-1, keepdims=True) + b2_ref[...]        # (C, 1)

    # hardsigmoid(s) = clip(s/6 + 0.5, 0, 1)
    scale = jnp.clip(s * (1.0 / 6.0) + 0.5, 0.0, 1.0)                 # (C, 1)

    # Channel-wise rescale of the resident x tile (broadcast along lanes).
    o_ref[...] = (x * scale).astype(o_ref.dtype)


def squeeze_excitation(x, w1t, b1, w2, b2):
    """x: (N, C, H, W); w1t: (C, S); b1: (S,); w2: (C, S); b2: (C,) -> (N, C, H, W)."""
    N, C, H, W = x.shape
    S = w1t.shape[1]
    HW = H * W

    x3 = x.reshape(N, C, HW)          # spatial on the lane axis (HW=256 -> lane-dense)
    b1r = b1.reshape(1, S)
    b2c = b2.reshape(C, 1)

    flops = int(N * (2 * C * HW + 4 * C * S))
    bytes_accessed = int((2 * N * C * HW + 2 * C * S + S + C) * jnp.dtype(x.dtype).itemsize)

    out = pl.pallas_call(
        _se_kernel,
        out_shape=jax.ShapeDtypeStruct((N, C, HW), x.dtype),
        grid=(N,),
        in_specs=[
            pl.BlockSpec((None, C, HW), lambda n: (n, 0, 0)),   # x: one image per step
            pl.BlockSpec((C, S), lambda n: (0, 0)),             # w1t: VMEM-resident
            pl.BlockSpec((1, S), lambda n: (0, 0)),             # b1
            pl.BlockSpec((C, S), lambda n: (0, 0)),             # w2
            pl.BlockSpec((C, 1), lambda n: (0, 0)),             # b2
        ],
        out_specs=pl.BlockSpec((None, C, HW), lambda n: (n, 0, 0)),
        compiler_params=pltpu.CompilerParams(
            dimension_semantics=("parallel",)),                 # megacore split on v7x
        cost_estimate=pl.CostEstimate(
            flops=flops, transcendentals=0, bytes_accessed=bytes_accessed),
    )(x3, w1t, b1r, w2, b2c)
    return out.reshape(N, C, H, W)


# ----------------------------------------------------------------------------
# Deterministic parameter construction (mirrors Conv2d-style uniform init)
# ----------------------------------------------------------------------------
def make_se_params(key, input_channels, squeeze_factor=4):
    squeeze_channels = _make_divisible(input_channels // squeeze_factor, 8)
    k1, k2, k3, k4 = jax.random.split(key, 4)
    bound1 = 1.0 / (input_channels ** 0.5)
    w1t = jax.random.uniform(k1, (input_channels, squeeze_channels), jnp.float32,
                             -bound1, bound1)          # = fc1.weight.T (squeezed)
    b1 = jax.random.uniform(k2, (squeeze_channels,), jnp.float32, -bound1, bound1)
    bound2 = 1.0 / (squeeze_channels ** 0.5)
    w2 = jax.random.uniform(k3, (input_channels, squeeze_channels), jnp.float32,
                            -bound2, bound2)           # = fc2.weight (squeezed)
    b2 = jax.random.uniform(k4, (input_channels,), jnp.float32, -bound2, bound2)
    return w1t, b1, w2, b2


# Pure-JAX reference for a sanity check.
def squeeze_excitation_ref(x, w1t, b1, w2, b2):
    pooled = x.mean(axis=(2, 3))                       # (N, C)
    h = jnp.maximum(pooled @ w1t + b1, 0.0)            # (N, S)
    s = h @ w2.T + b2                                  # (N, C)
    scale = jnp.clip(s / 6.0 + 0.5, 0.0, 1.0)          # hardsigmoid
    return x * scale[:, :, None, None]


if __name__ == "__main__":
    key = jax.random.PRNGKey(0)
    N, C, H, W = 2, 4, 16, 16                          # squeeze_channels -> 8

    pkey, xkey = jax.random.split(key)
    w1t, b1, w2, b2 = make_se_params(pkey, C, squeeze_factor=4)
    x = jax.random.normal(xkey, (N, C, H, W), jnp.float32)

    out = squeeze_excitation(x, w1t, b1, w2, b2)
    out = jax.block_until_ready(out)

    ref = squeeze_excitation_ref(x, w1t, b1, w2, b2)
    assert out.shape == (N, C, H, W)
    assert jnp.allclose(out, ref, atol=1e-5, rtol=1e-5)

    print("KERNEL_OK")
</pallas_src>

<mosaic_0001>
module attributes {stable_mosaic.version = 11 : i64} {
  func.func @_se_kernel(%arg0: i32, %arg1: memref<1x4x256xf32, #tpu.memory_space<vmem>>, %arg2: memref<4x8xf32, #tpu.memory_space<vmem>>, %arg3: memref<1x8xf32, #tpu.memory_space<vmem>>, %arg4: memref<4x8xf32, #tpu.memory_space<vmem>>, %arg5: memref<4x1xf32, #tpu.memory_space<vmem>>, %arg6: memref<1x4x256xf32, #tpu.memory_space<vmem>>) attributes {dimension_semantics = [#tpu.dimension_semantics<parallel>], iteration_bounds = array<i64: 2>, scalar_prefetch = 0 : i64, scratch_operands = 0 : i64, tpu.core_type = #tpu.core_type<tc>, window_params = [{transform_indices = @transform_0, window_bounds = array<i64: 1, 4, 256>}, {pipeline_mode = #tpu.pipeline_mode<synchronous>, transform_indices = @transform_1, window_bounds = array<i64: 4, 8>}, {pipeline_mode = #tpu.pipeline_mode<synchronous>, transform_indices = @transform_2, window_bounds = array<i64: 1, 8>}, {pipeline_mode = #tpu.pipeline_mode<synchronous>, transform_indices = @transform_3, window_bounds = array<i64: 4, 8>}, {pipeline_mode = #tpu.pipeline_mode<synchronous>, transform_indices = @transform_4, window_bounds = array<i64: 4, 1>}, {transform_indices = @transform_5, window_bounds = array<i64: 1, 4, 256>}]} {
    %c0 = arith.constant 0 : index
    %c0_0 = arith.constant 0 : index
    %c0_1 = arith.constant 0 : index
    %0 = vector.load %arg1[%c0, %c0_0, %c0_1] : memref<1x4x256xf32, #tpu.memory_space<vmem>>, vector<1x4x256xf32>
    %1 = vector.shape_cast %0 : vector<1x4x256xf32> to vector<4x256xf32>
    %cst = arith.constant dense<0.000000e+00> : vector<4xf32>
    %2 = vector.multi_reduction <add>, %1, %cst [1] : vector<4x256xf32> to vector<4xf32>
    %3 = vector.shape_cast %2 : vector<4xf32> to vector<4x1xf32>
    %cst_2 = arith.constant 3.906250e-03 : f32
    %4 = vector.broadcast %cst_2 : f32 to vector<4x1xf32>
    %5 = arith.mulf %3, %4 : vector<4x1xf32>
    %c0_3 = arith.constant 0 : index
    %c0_4 = arith.constant 0 : index
    %6 = vector.load %arg2[%c0_3, %c0_4] : memref<4x8xf32, #tpu.memory_space<vmem>>, vector<4x8xf32>
    %7 = vector.broadcast %5 : vector<4x1xf32> to vector<4x8xf32>
    %8 = arith.mulf %6, %7 : vector<4x8xf32>
    %cst_5 = arith.constant dense<0.000000e+00> : vector<8xf32>
    %9 = vector.multi_reduction <add>, %8, %cst_5 [0] : vector<4x8xf32> to vector<8xf32>
    %10 = vector.shape_cast %9 : vector<8xf32> to vector<1x8xf32>
    %c0_6 = arith.constant 0 : index
    %c0_7 = arith.constant 0 : index
    %11 = vector.load %arg3[%c0_6, %c0_7] : memref<1x8xf32, #tpu.memory_space<vmem>>, vector<1x8xf32>
    %12 = arith.addf %10, %11 : vector<1x8xf32>
    %cst_8 = arith.constant 0.000000e+00 : f32
    %13 = vector.broadcast %cst_8 : f32 to vector<1x8xf32>
    %14 = arith.maximumf %12, %13 : vector<1x8xf32>
    %c0_9 = arith.constant 0 : index
    %c0_10 = arith.constant 0 : index
    %15 = vector.load %arg4[%c0_9, %c0_10] : memref<4x8xf32, #tpu.memory_space<vmem>>, vector<4x8xf32>
    %16 = vector.broadcast %14 : vector<1x8xf32> to vector<4x8xf32>
    %17 = arith.mulf %15, %16 : vector<4x8xf32>
    %cst_11 = arith.constant dense<0.000000e+00> : vector<4xf32>
    %18 = vector.multi_reduction <add>, %17, %cst_11 [1] : vector<4x8xf32> to vector<4xf32>
    %19 = vector.shape_cast %18 : vector<4xf32> to vector<4x1xf32>
    %c0_12 = arith.constant 0 : index
    %c0_13 = arith.constant 0 : index
    %20 = vector.load %arg5[%c0_12, %c0_13] : memref<4x1xf32, #tpu.memory_space<vmem>>, vector<4x1xf32>
    %21 = arith.addf %19, %20 : vector<4x1xf32>
    %cst_14 = arith.constant 0.166666672 : f32
    %22 = vector.broadcast %cst_14 : f32 to vector<4x1xf32>
    %23 = arith.mulf %21, %22 : vector<4x1xf32>
    %cst_15 = arith.constant 5.000000e-01 : f32
    %24 = vector.broadcast %cst_15 : f32 to vector<4x1xf32>
    %25 = arith.addf %23, %24 : vector<4x1xf32>
    %cst_16 = arith.constant 0.000000e+00 : f32
    %cst_17 = arith.constant 1.000000e+00 : f32
    %26 = vector.broadcast %cst_16 : f32 to vector<4x1xf32>
    %27 = arith.maximumf %26, %25 : vector<4x1xf32>
    %28 = vector.broadcast %cst_17 : f32 to vector<4x1xf32>
    %29 = arith.minimumf %28, %27 : vector<4x1xf32>
    %30 = vector.broadcast %29 : vector<4x1xf32> to vector<4x256xf32>
    %31 = arith.mulf %1, %30 : vector<4x256xf32>
    %c0_18 = arith.constant 0 : index
    %c0_19 = arith.constant 0 : index
    %c0_20 = arith.constant 0 : index
    %32 = vector.load %arg6[%c0_18, %c0_19, %c0_20] : memref<1x4x256xf32, #tpu.memory_space<vmem>>, vector<1x4x256xf32>
    %33 = vector.shape_cast %32 : vector<1x4x256xf32> to vector<4x256xf32>
    %34 = vector.shape_cast %31 : vector<4x256xf32> to vector<1x4x256xf32>
    tpu.vector_store %arg6[%c0_18, %c0_19, %c0_20], %34 {strides = array<i32>} : memref<1x4x256xf32, #tpu.memory_space<vmem>>, vector<1x4x256xf32>,
    return
  }
  func.func @transform_0(%arg0: i32) -> (i32, i32, i32) {
    %c0_i32 = arith.constant 0 : i32
    %c0_i32_0 = arith.constant 0 : i32
    %c0_i32_1 = arith.constant 0 : i32
    return %arg0, %c0_i32, %c0_i32_0 : i32, i32, i32
  }
  func.func @transform_1(%arg0: i32) -> (i32, i32) {
    %c0_i32 = arith.constant 0 : i32
    %c0_i32_0 = arith.constant 0 : i32
    %c0_i32_1 = arith.constant 0 : i32
    return %c0_i32, %c0_i32_0 : i32, i32
  }
  func.func @transform_2(%arg0: i32) -> (i32, i32) {
    %c0_i32 = arith.constant 0 : i32
    %c0_i32_0 = arith.constant 0 : i32
    %c0_i32_1 = arith.constant 0 : i32
    return %c0_i32, %c0_i32_0 : i32, i32
  }
  func.func @transform_3(%arg0: i32) -> (i32, i32) {
    %c0_i32 = arith.constant 0 : i32
    %c0_i32_0 = arith.constant 0 : i32
    %c0_i32_1 = arith.constant 0 : i32
    return %c0_i32, %c0_i32_0 : i32, i32
  }
  func.func @transform_4(%arg0: i32) -> (i32, i32) {
    %c0_i32 = arith.constant 0 : i32
    %c0_i32_0 = arith.constant 0 : i32
    %c0_i32_1 = arith.constant 0 : i32
    return %c0_i32, %c0_i32_0 : i32, i32
  }
  func.func @transform_5(%arg0: i32) -> (i32, i32, i32) {
    %c0_i32 = arith.constant 0 : i32
    %c0_i32_0 = arith.constant 0 : i32
    %c0_i32_1 = arith.constant 0 : i32
    return %arg0, %c0_i32, %c0_i32_0 : i32, i32, i32
  }
}

</mosaic_0001>

<llo_original>
// kernel: tpu_custom_call.1
$region0: #{tpu_custom_call.1}
  #allocation0 [shape = 'u32[]', space=smem, size = 0x4, offset = 0x4, fixed_abs, tag = 'smem constant byte address 0x4 - core index']
  #allocation1 [shape = 'u32[144,128]{1,0:T(1,128)}', space=vmem, size = 0x12000, scoped, tag = 'internal scratch']
  %s0 = inlined_call_operand.hbm [shape: f32[2,4,256], index: 0, kind: input, shape index: {}]
  %s1 = inlined_call_operand.vmem [shape: f32[4,8], index: 1, kind: input, shape index: {}]
  %s2 = inlined_call_operand.hbm [shape: f32[1,8], index: 2, kind: input, shape index: {}]
  %s3 = inlined_call_operand.vmem [shape: f32[4,8], index: 3, kind: input, shape index: {}]
  %s4 = inlined_call_operand.vmem [shape: f32[4,1], index: 4, kind: input, shape index: {}]
  %s5 = inlined_call_operand.hbm [shape: f32[2,4,256], index: 5, kind: output, shape index: {}]
  %s6 = sld [smem:[#allocation0]]
  $region61: #{tpu_custom_call.1} parent=0
    _
  %s8 = ssub.s32 1, %s6
  %s9 = scalar_select 0, %s8, %s6
  $region1: #{tpu_custom_call.1} parent=0
    #allocation2 [shape = 'u8[8192]{0}', space=vmem, size = 0x2000, scoped, tag = 'input window, operand 0']
    #allocation3 [shape = 's32[2]{0}', space=sflag, size = 0x8, scoped, tag = 'scoped memory for tpu_custom_call.1']
    #allocation4 [shape = 's32[2]{0}', space=sflag, size = 0x8, scoped, tag = 'scoped memory for tpu_custom_call.1']
    #allocation5 [shape = 'u8[512]{0}', space=vmem, size = 0x400, scoped, tag = 'input window, operand 2, single buffered']
    #allocation6 [shape = 's32[1]{0}', space=sflag, size = 0x4, scoped, tag = 'scoped memory for tpu_custom_call.1']
    #allocation7 [shape = 'u8[8192]{0}', space=vmem, size = 0x2000, scoped, tag = 'output window, operand 0']
    %10 = vsyncpa [#allocation3], 0
    %s11 = scalar_lea.sflag [#allocation3], 1
    %12 = vsyncpa %s11, 0
    %13 = vsyncpa [#allocation6], 0
    %14 = vsyncpa [#allocation4], 0
    %s15 = scalar_lea.sflag [#allocation4], 1
    %16 = vsyncpa %s15, 0
    loop: start=0, step=1, limit=4
    $region2: #{tpu_custom_call.1} parent=1 // loop_pre_header
      _
    $region3: #{tpu_custom_call.1} parent=1 // loop_header
      %s18 = sphi 0, %s22
      %p19 = scmp.ge.s32.totalorder %s18, 4
      %s28 = sphi 0, %s30
      %s31 = sphi 0, %s28
      %s32 = sphi 0, %s31
      %s48 = sphi 0, %s32
      %s52 = sphi 0, %s52
      %s54 = sphi 0, %s52
      %s55 = sphi 0, %s54
      %s69 = sphi 0, %s55
      %s73 = sphi 0, %s73
      %s75 = sphi 0, %s73
      %s76 = sphi 0, %s75
      %s90 = sphi 0, %s76
      %s94 = sphi 0, %s94
      %s96 = sphi 0, %s94
      %s97 = sphi 0, %s96
      %s111 = sphi 0, %s97
      %s115 = sphi 0, %s115
      %s117 = sphi 0, %s115
      %s118 = sphi 0, %s117
      %s132 = sphi 0, %s118
      %s138 = sphi 0, %s140
      %s141 = sphi 0, %s138
      %s142 = sphi 0, %s141
      %s158 = sphi 0, %s142
    $region4: #{tpu_custom_call.1} parent=1 // loop_header_branch
      %21 = sbr.rel (%p19) target = $region8
    $region5: #{tpu_custom_call.1} parent=1 // loop_body
      %s23 = ssub.s32 %s18, 1
      %s24 = ssub.s32 %s18, 2
      %s25 = sadd.s32 %s18, 1
      %s26 = ssub.s32 %s18, %s25
      %p27 = scmp.eq.s32.totalorder %s26, 0
      %s29 = sadd.s32 %s28, 1
      %s30 = scalar_select %p27, %s28, %s29
      %p33 = pneg %p27
      %p34 = scmp.eq.s32.totalorder %s18, 1
      %p35 = por %p33, %p34
      %p36 = scmp.ne.s32.totalorder %s28, %s31
      %p37 = scmp.eq.s32.totalorder %s18, 0
      %p38 = por %p36, %p37
      %p39 = scmp.ne.s32.totalorder %s28, %s31
      %p40 = scmp.eq.s32.totalorder %s23, 1
      %p41 = por %p39, %p40
      %p42 = scmp.ne.s32.totalorder %s31, %s32
      %p43 = scmp.eq.s32.totalorder %s23, 0
      %p44 = por %p42, %p43
      %p45 = scmp.ne.s32.totalorder %s31, %s32
      %p46 = scmp.eq.s32.totalorder %s24, 1
      %p47 = por %p45, %p46
      %p49 = scmp.ne.s32.totalorder %s32, %s48
      %p50 = scmp.eq.s32.totalorder %s24, 0
      %p51 = por %p49, %p50
      %s53 = sadd.s32 %s52, 1
      %p56 = scmp.eq.s32.totalorder %s18, 1
      %p57 = scmp.ne.s32.totalorder %s52, %s54
      %p58 = scmp.eq.s32.totalorder %s18, 0
      %p59 = por %p57, %p58
      %p60 = scmp.ne.s32.totalorder %s52, %s54
      %p61 = scmp.eq.s32.totalorder %s23, 1
      %p62 = por %p60, %p61
      %p63 = scmp.ne.s32.totalorder %s54, %s55
      %p64 = scmp.eq.s32.totalorder %s23, 0
      %p65 = por %p63, %p64
      %p66 = scmp.ne.s32.totalorder %s54, %s55
      %p67 = scmp.eq.s32.totalorder %s24, 1
      %p68 = por %p66, %p67
      %p70 = scmp.ne.s32.totalorder %s55, %s69
      %p71 = scmp.eq.s32.totalorder %s24, 0
      %p72 = por %p70, %p71
      %s74 = sadd.s32 %s73, 1
      %p77 = scmp.eq.s32.totalorder %s18, 1
      %p78 = scmp.ne.s32.totalorder %s73, %s75
      %p79 = scmp.eq.s32.totalorder %s18, 0
      %p80 = por %p78, %p79
      %p81 = scmp.ne.s32.totalorder %s73, %s75
      %p82 = scmp.eq.s32.totalorder %s23, 1
      %p83 = por %p81, %p82
      %p84 = scmp.ne.s32.totalorder %s75, %s76
      %p85 = scmp.eq.s32.totalorder %s23, 0
      %p86 = por %p84, %p85
      %p87 = scmp.ne.s32.totalorder %s75, %s76
      %p88 = scmp.eq.s32.totalorder %s24, 1
      %p89 = por %p87, %p88
      %p91 = scmp.ne.s32.totalorder %s76, %s90
      %p92 = scmp.eq.s32.totalorder %s24, 0
      %p93 = por %p91, %p92
      %s95 = sadd.s32 %s94, 1
      %p98 = scmp.eq.s32.totalorder %s18, 1
      %p99 = scmp.ne.s32.totalorder %s94, %s96
      %p100 = scmp.eq.s32.totalorder %s18, 0
      %p101 = por %p99, %p100
      %p102 = scmp.ne.s32.totalorder %s94, %s96
      %p103 = scmp.eq.s32.totalorder %s23, 1
      %p104 = por %p102, %p103
      %p105 = scmp.ne.s32.totalorder %s96, %s97
      %p106 = scmp.eq.s32.totalorder %s23, 0
      %p107 = por %p105, %p106
      %p108 = scmp.ne.s32.totalorder %s96, %s97
      %p109 = scmp.eq.s32.totalorder %s24, 1
      %p110 = por %p108, %p109
      %p112 = scmp.ne.s32.totalorder %s97, %s111
      %p113 = scmp.eq.s32.totalorder %s24, 0
      %p114 = por %p112, %p113
      %s116 = sadd.s32 %s115, 1
      %p119 = scmp.eq.s32.totalorder %s18, 1
      %p120 = scmp.ne.s32.totalorder %s115, %s117
      %p121 = scmp.eq.s32.totalorder %s18, 0
      %p122 = por %p120, %p121
      %p123 = scmp.ne.s32.totalorder %s115, %s117
      %p124 = scmp.eq.s32.totalorder %s23, 1
      %p125 = por %p123, %p124
      %p126 = scmp.ne.s32.totalorder %s117, %s118
      %p127 = scmp.eq.s32.totalorder %s23, 0
      %p128 = por %p126, %p127
      %p129 = scmp.ne.s32.totalorder %s117, %s118
      %p130 = scmp.eq.s32.totalorder %s24, 1
      %p131 = por %p129, %p130
      %p133 = scmp.ne.s32.totalorder %s118, %s132
      %p134 = scmp.eq.s32.totalorder %s24, 0
      %p135 = por %p133, %p134
      %s136 = ssub.s32 %s18, %s25
      %p137 = scmp.eq.s32.totalorder %s136, 0
      %s139 = sadd.s32 %s138, 1
      %s140 = scalar_select %p137, %s138, %s139
      %p143 = pneg %p137
      %p144 = scmp.eq.s32.totalorder %s18, 1
      %p145 = por %p143, %p144
      %p146 = scmp.ne.s32.totalorder %s138, %s141
      %p147 = scmp.eq.s32.totalorder %s18, 0
      %p148 = por %p146, %p147
      %p149 = scmp.ne.s32.totalorder %s138, %s141
      %p150 = scmp.eq.s32.totalorder %s23, 1
      %p151 = por %p149, %p150
      %p152 = scmp.ne.s32.totalorder %s141, %s142
      %p153 = scmp.eq.s32.totalorder %s23, 0
      %p154 = por %p152, %p153
      %p155 = scmp.ne.s32.totalorder %s141, %s142
      %p156 = scmp.eq.s32.totalorder %s24, 1
      %p157 = por %p155, %p156
      %p159 = scmp.ne.s32.totalorder %s142, %s158
      %p160 = scmp.eq.s32.totalorder %s24, 0
      %p161 = por %p159, %p160
      %p162 = scmp.le.s32.totalorder 1, %s18
      %p163 = scmp.lt.s32.totalorder %s18, 3
      %p164 = pnand %p162, %p163
      %p165 = pneg %p164
      // Predicated region
      $region9: #{tpu_custom_call.1} parent=5 // pred_check
        _
      $region10: #{tpu_custom_call.1} parent=5 // pred_check_branch
        %167 = sbr.rel (%p164) target = $region12
      $region11: #{tpu_custom_call.1} parent=5 // pred_region
        %s168 = ssub.s32 %s18, 1
        // Predicated region
        $region13: #{tpu_custom_call.1} parent=11 // pred_check
          %p169 = pneg %p65
        $region14: #{tpu_custom_call.1} parent=11 // pred_check_branch
          %171 = sbr.rel (%p169) target = $region16
        $region15: #{tpu_custom_call.1} parent=11 // pred_region
          _
        $region16: #{tpu_custom_call.1} parent=11 // pred_fallthru
          _
        // Predicated region
        $region17: #{tpu_custom_call.1} parent=11 // pred_check
          %p172 = pneg %p86
        $region18: #{tpu_custom_call.1} parent=11 // pred_check_branch
          %174 = sbr.rel (%p172) target = $region20
        $region19: #{tpu_custom_call.1} parent=11 // pred_region
          %s176 = ssub.s32 16, 16
          %177 = vsyncadd [#allocation6], %s176
          %s179 = sshll.u32 [#allocation5], 4
          %s180 = int_to_ptr.vmem [resolvable:$true] %s179
          %182 = dma.hbm_to_vmem [thread:$0]  %s2, 16, %s180, [#allocation6]
        $region20: #{tpu_custom_call.1} parent=11 // pred_fallthru
          _
        // Predicated region
        $region21: #{tpu_custom_call.1} parent=11 // pred_check
          %p183 = pneg %p107
        $region22: #{tpu_custom_call.1} parent=11 // pred_check_branch
          %185 = sbr.rel (%p183) target = $region24
        $region23: #{tpu_custom_call.1} parent=11 // pred_region
          _
        $region24: #{tpu_custom_call.1} parent=11 // pred_fallthru
          _
        // Predicated region
        $region25: #{tpu_custom_call.1} parent=11 // pred_check
          %p186 = pneg %p128
        $region26: #{tpu_custom_call.1} parent=11 // pred_check_branch
          %188 = sbr.rel (%p186) target = $region28
        $region27: #{tpu_custom_call.1} parent=11 // pred_region
          _
        $region28: #{tpu_custom_call.1} parent=11 // pred_fallthru
          _
      $region12: #{tpu_custom_call.1} parent=5 // pred_fallthru
        _
      %p189 = scmp.lt.s32.totalorder %s18, 2
      // Predicated region
      $region29: #{tpu_custom_call.1} parent=5 // pred_check
        %p190 = pneg %p189
      $region30: #{tpu_custom_call.1} parent=5 // pred_check_branch
        %192 = sbr.rel (%p190) target = $region32
      $region31: #{tpu_custom_call.1} parent=5 // pred_region
        // Predicated region
        $region33: #{tpu_custom_call.1} parent=31 // pred_check
          %p193 = pneg %p38
        $region34: #{tpu_custom_call.1} parent=31 // pred_check_branch
          %195 = sbr.rel (%p193) target = $region36
        $region35: #{tpu_custom_call.1} parent=31 // pred_region
          %s196 = sand.u32 %s28, 1
          %s197 = scalar_lea.sflag [#allocation3], %s196
          %s198 = sand.u32 %s28, 1
          %s199 = smul.addr %s198, 8
          %s200 = scalar_lea.vmem [#allocation2], %s199
          %s202 = ssub.s32 128, 128
          %203 = vsyncadd %s197, %s202
          %s204 = smul.addr %s18, 2
          %s205 = smul.addr %s204, 64
          %s206 = scalar_lea.hbm %s0, %s205
          %s208 = sshll.u32 %s200, 4
          %s209 = int_to_ptr.vmem [resolvable:$true] %s208
          %211 = dma.hbm_to_vmem [thread:$0]  %s206, 128, %s209, %s197
        $region36: #{tpu_custom_call.1} parent=31 // pred_fallthru
          _
      $region32: #{tpu_custom_call.1} parent=5 // pred_fallthru
        _
      %p212 = scmp.le.s32.totalorder 1, %s18
      %p213 = scmp.lt.s32.totalorder %s18, 3
      %p214 = pnand %p212, %p213
      %p215 = pneg %p214
      // Predicated region
      $region37: #{tpu_custom_call.1} parent=5 // pred_check
        _
      $region38: #{tpu_custom_call.1} parent=5 // pred_check_branch
        %217 = sbr.rel (%p214) target = $region40
      $region39: #{tpu_custom_call.1} parent=5 // pred_region
        %s218 = ssub.s32 %s18, 1
        %s219 = sand.u32 %s31, 1
        %s220 = scalar_lea.sflag [#allocation3], %s219
        %s221 = sand.u32 %s31, 1
        %s222 = smul.addr %s221, 8
        %s223 = scalar_lea.vmem [#allocation2], %s222
        // Predicated region
        $region41: #{tpu_custom_call.1} parent=39 // pred_check
          %p224 = pneg %p44
        $region42: #{tpu_custom_call.1} parent=39 // pred_check_branch
          %226 = sbr.rel (%p224) target = $region44
        $region43: #{tpu_custom_call.1} parent=39 // pred_region
          %227 = dma.done %s220, 128
        $region44: #{tpu_custom_call.1} parent=39 // pred_fallthru
          _
        // Predicated region
        $region45: #{tpu_custom_call.1} parent=39 // pred_check
          %p228 = pneg %p86
        $region46: #{tpu_custom_call.1} parent=39 // pred_check_branch
          %230 = sbr.rel (%p228) target = $region48
        $region47: #{tpu_custom_call.1} parent=39 // pred_region
          %231 = dma.done [#allocation6], 16
        $region48: #{tpu_custom_call.1} parent=39 // pred_fallthru
          _
        %s232 = sand.u32 %s31, 1
        %s233 = scalar_lea.sflag [#allocation3], %s232
        %s234 = sand.u32 %s31, 1
        %s235 = smul.addr %s234, 8
        %s236 = scalar_lea.vmem [#allocation2], %s235
        %p237 = pneg %p44
        %p238 = pneg %p41
        %p239 = pneg %p65
        %p240 = pneg %p62
        %p241 = pneg %p86
        %p242 = pneg %p83
        %p243 = pneg %p107
        %p244 = pneg %p104
        %p245 = pneg %p128
        %p246 = pneg %p125
        %p247 = pneg %p154
        %p248 = pneg %p151
        %s249 = sand.u32 %s141, 1
        %s250 = scalar_lea.sflag [#allocation4], %s249
        %s251 = sand.u32 %s141, 1
        %s252 = smul.addr %s251, 8
        %s253 = scalar_lea.vmem [#allocation7], %s252
        %v254 = vld [vmem:[%s223] sm:$0xff]
        %v256 = vcombine.high %v254, %v254
        %vm258 = vcmask 1043456
        %v259 = vsel %vm258, %v254, 0.0
        %v260 = vsel %vm258, %v256, 0.0
        %v261 = vadd.f32 %v259, %v260
        %262 = vadd.xlane.f32.xlu0 %v261
        %v263 = vpop.xlane.xlu0 %262
        %v264 = vmul.f32 %v263, 0.00390625
        %v265 = vld [vmem:[%s1] sm:$0xf]
        %v266 = vmul.f32 %v265, %v264
        %vm267 = vcmask 60416
        %v268 = vsel %vm267, %v266, 0.0
        %v269 = vrot.slane %v268, 4
        %v270 = vadd.f32 %v268, %v269
        %v271 = vrot.slane %v270, 2
        %v272 = vadd.f32 %v270, %v271
        %v273 = vrot.slane %v272, 1
        %v274 = vadd.f32 %v272, %v273
        %v275 = vld [vmem:[#allocation5] sm:$0x1]
        %v276 = vadd.f32 %v274, %v275
        %v277 = vmax.f32 %v276, 0.0
        %v278 = vld [vmem:[%s3] sm:$0xf]
        %v279 = vlaneseq
        %v280 = vshrl.u32 %v279, 7
        %v281 = vsub.s32 0, %v280
        %v282 = vrot.slane %v277, %v281
        %v283 = vmul.f32 %v278, %v282
        %v284 = vsel %vm267, %v283, 0.0
        %285 = vadd.xlane.f32.xlu0 %v284
        %v286 = vpop.xlane.xlu0 %285
        %v287 = vld [vmem:[%s4] sm:$0xf]
        %v288 = vadd.f32 %v286, %v287
        %v289 = vmul.f32 %v288, 0.16666667
        %v290 = vadd.f32 %v289, 0.5
        %v291 = vmax.f32 %v290, 0.0
        %v292 = vmin.f32 %v291, 1.0
        %294 = vset.pattern.permute.xlu0 0
        %295 = vperm.xlu0 %294, %v292
        %v296 = vpop.permute.xlu0 %295
        %v298 = vunpack.c.l.s4 839922192
        %v299 = vunpack.c.0.s8 %v298
        %v300 = vlaneseq
        %v301 = vshrl.u32 %v300, 7
        %v302 = vsub.s32 %v299, %v301
        %v303 = vrot.slane %v296, %v302
        %v305 = vmul.f32 %v254, %v303
        %306 = vst [vmem:[%s253] sm:$0xff] %v305
        %s307 = sand.u32 %s141, 1
        %s308 = scalar_lea.sflag [#allocation4], %s307
        %s309 = sand.u32 %s141, 1
        %s310 = smul.addr %s309, 8
        %s311 = scalar_lea.vmem [#allocation7], %s310
        // Predicated region
        $region49: #{tpu_custom_call.1} parent=39 // pred_check
          %p312 = pneg %p151
        $region50: #{tpu_custom_call.1} parent=39 // pred_check_branch
          %314 = sbr.rel (%p312) target = $region52
        $region51: #{tpu_custom_call.1} parent=39 // pred_region
          %s316 = ssub.s32 128, 128
          %317 = vsyncadd %s308, %s316
          %s318 = smul.addr %s23, 2
          %s319 = smul.addr %s318, 64
          %s320 = scalar_lea.hbm %s5, %s319
          %s322 = sshll.u32 %s311, 4
          %s323 = int_to_ptr.vmem [resolvable:$true] %s322
          %325 = dma.vmem_to_hbm [thread:$0]  %s323, 128, %s320, %s308
        $region52: #{tpu_custom_call.1} parent=39 // pred_fallthru
          _
      $region40: #{tpu_custom_call.1} parent=5 // pred_fallthru
        _
      %p326 = scmp.le.s32.totalorder 2, %s18
      // Predicated region
      $region53: #{tpu_custom_call.1} parent=5 // pred_check
        %p327 = pneg %p326
      $region54: #{tpu_custom_call.1} parent=5 // pred_check_branch
        %329 = sbr.rel (%p327) target = $region56
      $region55: #{tpu_custom_call.1} parent=5 // pred_region
        %s330 = ssub.s32 %s18, 2
        // Predicated region
        $region57: #{tpu_custom_call.1} parent=55 // pred_check
          %p331 = pneg %p157
        $region58: #{tpu_custom_call.1} parent=55 // pred_check_branch
          %333 = sbr.rel (%p331) target = $region60
        $region59: #{tpu_custom_call.1} parent=55 // pred_region
          %s334 = sand.u32 %s142, 1
          %s335 = scalar_lea.sflag [#allocation4], %s334
          %s336 = sand.u32 %s142, 1
          %s337 = smul.addr %s336, 8
          %s338 = scalar_lea.vmem [#allocation7], %s337
          %339 = dma.done %s335, 128
        $region60: #{tpu_custom_call.1} parent=55 // pred_fallthru
          _
      $region56: #{tpu_custom_call.1} parent=5 // pred_fallthru
        _
    $region6: #{tpu_custom_call.1} parent=1 // loop_footer
      %s22 = sadd.s32 1, %s18
    $region7: #{tpu_custom_call.1} parent=1 // loop_footer_branch
      %17 = sbr.rel target = $region3
    $region8: #{tpu_custom_call.1} parent=1 // loop_exit
      _
    %340 = vsyncpa [#allocation3], 1
    %s341 = scalar_lea.sflag [#allocation3], 1
    %342 = vsyncpa %s341, 1
    %343 = vsyncpa [#allocation6], 1
    %344 = vsyncpa [#allocation4], 1
    %s345 = scalar_lea.sflag [#allocation4], 1
    %346 = vsyncpa %s345, 1

</llo_original>
